<compile_context>
chip_gen: v7x
topology: tpu7x:2x2x1
jax: 0.10.0
libtpu: 0.0.40
codegen_flags: <defaults>
</compile_context>

<pallas_src>
import jax
import jax.numpy as jnp
from jax.experimental import pallas as pl
from jax.experimental.pallas import tpu as pltpu


def _conv_bn_silu_kernel(w_ref, bias_ref, x_ref, o_ref):
    # w_ref:    (TC2, C1)     1x1 conv weight with BN scale pre-folded (x.dtype)
    # bias_ref: (TC2, 1)      BN bias  = beta - running_mean * scale  (f32)
    # x_ref:    (1, C1, THW)  lane-dense flattened spatial tile
    # o_ref:    (1, TC2, THW)
    x = x_ref[0]                                                     # (C1, THW)
    y = jnp.dot(w_ref[...], x, preferred_element_type=jnp.float32)   # MXU, f32 acc
    y = y + bias_ref[...]                                            # fused BN bias
    y = y * jax.nn.sigmoid(y)                                        # SiLU (VPU/EUP)
    o_ref[0] = y.astype(o_ref.dtype)


def _vmem_budget_bytes():
    """Per-generation byte budget for the pipelined blocks + explicit VMEM limit."""
    try:
        cap = int(pltpu.get_tpu_info().vmem_capacity_bytes)
    except Exception:
        cap = 64 << 20  # conservative: v7x per-TC physical VMEM
    budget = min(cap // 2, 48 << 20)                    # for double-buffered I/O blocks
    limit = min(cap - (4 << 20), budget + (16 << 20))   # + headroom for compiler scratch
    limit = max(limit, budget)
    return budget, limit


def _pick_c2_tile(c2):
    """Tile output channels (multiple of 256 = MXU height) only when C2 is large."""
    if c2 >= 1024 and c2 % 256 == 0:
        return 512 if c2 % 512 == 0 else 256
    return c2


def _pick_hw_tile(hw_pad, c1, tc2, io_bytes, budget, n_batch):
    """Largest multiple-of-128 tile dividing hw_pad that fits the VMEM budget.

    Prefers a tile count >= 2 (even when possible) for n_batch == 1 so the
    parallel grid splits across both v7x TensorCores.
    """
    m = hw_pad // 128
    # double-buffered input + output blocks per spatial element, plus f32 epilogue temp
    per_elem = 2 * (c1 + tc2) * io_bytes + tc2 * 4
    cap_units = max(1, (budget // per_elem) // 128)
    divs = [d for d in range(1, m + 1) if m % d == 0]
    cands = [d for d in divs if d <= cap_units] or [1]
    if n_batch == 1 and m >= 2:
        even = [d for d in cands if (m // d) % 2 == 0]
        if even:
            cands = even
        else:
            ge2 = [d for d in cands if (m // d) >= 2]
            if ge2:
                cands = ge2
    return max(cands) * 128


def conv_bn_silu(x, weight, gamma, beta, running_mean, running_var, eps=1e-5):
    """Fused Conv2d(k=1, s=1, p=0, g=1, bias=False) + BatchNorm2d(eval) + SiLU.

    x:      (N, C1, H, W)  NCHW, like the PyTorch module
    weight: (C2, C1, 1, 1) conv weight
    gamma, beta, running_mean, running_var: (C2,) BatchNorm parameters
    """
    N, C1, H, W = x.shape
    C2 = weight.shape[0]
    assert weight.shape == (C2, C1, 1, 1), "kernel specialized to k=1 (module default)"

    # ---- fold BN (eval) into the weight (scale) and a per-channel bias ----
    scale = gamma.astype(jnp.float32) / jnp.sqrt(running_var.astype(jnp.float32) + eps)
    bias = (beta.astype(jnp.float32) - running_mean.astype(jnp.float32) * scale).reshape(C2, 1)
    w2d = (weight.reshape(C2, C1).astype(jnp.float32) * scale[:, None]).astype(x.dtype)

    # ---- lane-dense spatial layout: flatten H*W, pad to multiple of 128 ----
    HW = H * W
    hw_pad = ((HW + 127) // 128) * 128
    x_flat = x.reshape(N, C1, HW)
    if hw_pad != HW:
        x_flat = jnp.pad(x_flat, ((0, 0), (0, 0), (0, hw_pad - HW)))

    # ---- budget-based, generation-aware tiling ----
    io_bytes = x.dtype.itemsize
    budget, vmem_limit = _vmem_budget_bytes()
    tc2 = _pick_c2_tile(C2)
    thw = _pick_hw_tile(hw_pad, C1, tc2, io_bytes, budget, N)
    n_hw = hw_pad // thw
    n_c2 = C2 // tc2

    # Deeper input buffering only for tiny-channel layers (small DMAs, enough steps).
    x_index_map = lambda n, c, t: (n, 0, t)
    if C1 <= 16 and (N * n_hw) >= 4:
        try:
            x_spec = pl.BlockSpec((1, C1, thw), x_index_map, pipeline_mode=pl.Buffered(3))
        except TypeError:
            x_spec = pl.BlockSpec((1, C1, thw), x_index_map)
    else:
        x_spec = pl.BlockSpec((1, C1, thw), x_index_map)

    out_flat = pl.pallas_call(
        _conv_bn_silu_kernel,
        out_shape=jax.ShapeDtypeStruct((N, C2, hw_pad), x.dtype),
        grid_spec=pltpu.PrefetchScalarGridSpec(
            num_scalar_prefetch=0,
            grid=(N, n_c2, n_hw),
            in_specs=[
                pl.BlockSpec((tc2, C1), lambda n, c, t: (c, 0)),  # folded weight (resident)
                pl.BlockSpec((tc2, 1), lambda n, c, t: (c, 0)),   # BN bias
                x_spec,                                           # activations
            ],
            out_specs=pl.BlockSpec((1, tc2, thw), lambda n, c, t: (n, c, t)),
        ),
        compiler_params=pltpu.CompilerParams(
            dimension_semantics=("parallel", "parallel", "parallel"),
            vmem_limit_bytes=int(vmem_limit),
        ),
    )(w2d, bias, x_flat)

    out = out_flat[:, :, :HW] if hw_pad != HW else out_flat
    return out.reshape(N, C2, H, W)


def _reference(x, weight, gamma, beta, running_mean, running_var, eps=1e-5):
    """Pure-JAX mirror of the PyTorch forward (eval-mode BN) for verification."""
    C2 = weight.shape[0]
    w2d = weight.reshape(C2, -1).astype(jnp.float32)
    y = jnp.einsum('nchw,oc->nohw', x.astype(jnp.float32), w2d)
    scale = gamma.astype(jnp.float32) / jnp.sqrt(running_var.astype(jnp.float32) + eps)
    bias = beta.astype(jnp.float32) - running_mean.astype(jnp.float32) * scale
    y = y * scale[None, :, None, None] + bias[None, :, None, None]
    y = y * jax.nn.sigmoid(y)
    return y.astype(x.dtype)


if __name__ == "__main__":
    key = jax.random.PRNGKey(0)
    N, C1, C2, H, W = 2, 4, 8, 16, 16

    k_x, k_w, k_g, k_b, k_m, k_v = jax.random.split(key, 6)
    x = jax.random.normal(k_x, (N, C1, H, W), dtype=jnp.float32)
    weight = jax.random.normal(k_w, (C2, C1, 1, 1), dtype=jnp.float32) * 0.1
    gamma = jax.random.normal(k_g, (C2,), dtype=jnp.float32) * 0.1 + 1.0
    beta = jax.random.normal(k_b, (C2,), dtype=jnp.float32) * 0.1
    running_mean = jax.random.normal(k_m, (C2,), dtype=jnp.float32) * 0.1
    running_var = jax.random.uniform(k_v, (C2,), dtype=jnp.float32,
                                     minval=0.5, maxval=1.5)

    out = conv_bn_silu(x, weight, gamma, beta, running_mean, running_var)
    out = jax.block_until_ready(out)

    ref = _reference(x, weight, gamma, beta, running_mean, running_var)
    assert out.shape == (N, C2, H, W), out.shape
    assert jnp.allclose(out, ref, atol=1e-4, rtol=1e-4), "mismatch vs reference"

    print("KERNEL_OK")
</pallas_src>

<mosaic_0001>
module attributes {stable_mosaic.version = 11 : i64} {
  func.func @_conv_bn_silu_kernel(%arg0: i32, %arg1: i32, %arg2: i32, %arg3: memref<8x4xf32, #tpu.memory_space<vmem>>, %arg4: memref<8x1xf32, #tpu.memory_space<vmem>>, %arg5: memref<1x4x256xf32, #tpu.memory_space<vmem>>, %arg6: memref<1x8x256xf32, #tpu.memory_space<vmem>>) attributes {dimension_semantics = [#tpu.dimension_semantics<parallel>, #tpu.dimension_semantics<parallel>, #tpu.dimension_semantics<parallel>], iteration_bounds = array<i64: 2, 1, 1>, scalar_prefetch = 0 : i64, scratch_operands = 0 : i64, tpu.core_type = #tpu.core_type<tc>, window_params = [{transform_indices = @transform_0, window_bounds = array<i64: 8, 4>}, {transform_indices = @transform_1, window_bounds = array<i64: 8, 1>}, {transform_indices = @transform_2, window_bounds = array<i64: 1, 4, 256>}, {transform_indices = @transform_3, window_bounds = array<i64: 1, 8, 256>}]} {
    %c0 = arith.constant 0 : index
    %c0_0 = arith.constant 0 : index
    %c0_1 = arith.constant 0 : index
    %0 = vector.load %arg5[%c0, %c0_0, %c0_1] : memref<1x4x256xf32, #tpu.memory_space<vmem>>, vector<1x4x256xf32>
    %1 = vector.shape_cast %0 : vector<1x4x256xf32> to vector<4x256xf32>
    %c0_2 = arith.constant 0 : index
    %c0_3 = arith.constant 0 : index
    %2 = vector.load %arg3[%c0_2, %c0_3] : memref<8x4xf32, #tpu.memory_space<vmem>>, vector<8x4xf32>
    %cst = arith.constant dense<0.000000e+00> : vector<8x256xf32>
    %3 = tpu.matmul %2, %1, %cst {dimension_numbers = #tpu.dot_dimension_numbers<[1], [0], [0], [1], [0, 0, 1, 1], [], []>} : vector<8x4xf32>, vector<4x256xf32>, vector<8x256xf32> -> vector<8x256xf32>
    %c0_4 = arith.constant 0 : index
    %c0_5 = arith.constant 0 : index
    %4 = vector.load %arg4[%c0_4, %c0_5] : memref<8x1xf32, #tpu.memory_space<vmem>>, vector<8x1xf32>
    %5 = vector.broadcast %4 : vector<8x1xf32> to vector<8x256xf32>
    %6 = arith.addf %3, %5 : vector<8x256xf32>
    %7 = arith.negf %6 : vector<8x256xf32>
    %8 = math.exp %7 : vector<8x256xf32>
    %cst_6 = arith.constant 1.000000e+00 : f32
    %9 = vector.broadcast %cst_6 : f32 to vector<8x256xf32>
    %10 = arith.addf %9, %8 : vector<8x256xf32>
    %11 = arith.divf %9, %10 : vector<8x256xf32>
    %12 = arith.mulf %6, %11 : vector<8x256xf32>
    %c0_7 = arith.constant 0 : index
    %c0_8 = arith.constant 0 : index
    %c0_9 = arith.constant 0 : index
    %13 = vector.load %arg6[%c0_7, %c0_8, %c0_9] : memref<1x8x256xf32, #tpu.memory_space<vmem>>, vector<1x8x256xf32>
    %14 = vector.shape_cast %13 : vector<1x8x256xf32> to vector<8x256xf32>
    %15 = vector.shape_cast %12 : vector<8x256xf32> to vector<1x8x256xf32>
    tpu.vector_store %arg6[%c0_7, %c0_8, %c0_9], %15 {strides = array<i32>} : memref<1x8x256xf32, #tpu.memory_space<vmem>>, vector<1x8x256xf32>,
    return
  }
  func.func @transform_0(%arg0: i32, %arg1: i32, %arg2: i32) -> (i32, i32) {
    %c0_i32 = arith.constant 0 : i32
    %c0_i32_0 = arith.constant 0 : i32
    return %arg1, %c0_i32 : i32, i32
  }
  func.func @transform_1(%arg0: i32, %arg1: i32, %arg2: i32) -> (i32, i32) {
    %c0_i32 = arith.constant 0 : i32
    %c0_i32_0 = arith.constant 0 : i32
    return %arg1, %c0_i32 : i32, i32
  }
  func.func @transform_2(%arg0: i32, %arg1: i32, %arg2: i32) -> (i32, i32, i32) {
    %c0_i32 = arith.constant 0 : i32
    %c0_i32_0 = arith.constant 0 : i32
    return %arg0, %c0_i32, %arg2 : i32, i32, i32
  }
  func.func @transform_3(%arg0: i32, %arg1: i32, %arg2: i32) -> (i32, i32, i32) {
    %c0_i32 = arith.constant 0 : i32
    return %arg0, %arg1, %arg2 : i32, i32, i32
  }
}

</mosaic_0001>

<llo_original>
// kernel: tpu_custom_call.1
$region0: #{tpu_custom_call.1}
  #allocation0 [shape = 'u32[]', space=smem, size = 0x4, offset = 0x4, fixed_abs, tag = 'smem constant byte address 0x4 - core index']
  #allocation1 [shape = 'u32[144,128]{1,0:T(1,128)}', space=vmem, size = 0x12000, scoped, tag = 'internal scratch']
  %s0 = inlined_call_operand.vmem [shape: f32[8,4], index: 0, kind: input, shape index: {}]
  %s1 = inlined_call_operand.vmem [shape: f32[8,1], index: 1, kind: input, shape index: {}]
  %s2 = inlined_call_operand.vmem [shape: f32[2,4,256], index: 2, kind: input, shape index: {}]
  %s3 = inlined_call_operand.hbm [shape: f32[2,8,256], index: 3, kind: output, shape index: {}]
  %s4 = sld [smem:[#allocation0]]
  $region45: #{tpu_custom_call.1} parent=0
    _
  %s6 = ssub.s32 1, %s4
  %s7 = scalar_select 0, %s6, %s4
  $region1: #{tpu_custom_call.1} parent=0
    #allocation2 [shape = 'u8[16384]{0}', space=vmem, size = 0x4000, scoped, tag = 'output window, operand 0']
    #allocation3 [shape = 's32[2]{0}', space=sflag, size = 0x8, scoped, tag = 'scoped memory for tpu_custom_call.1']
    %8 = vsyncpa [#allocation3], 0
    %s9 = scalar_lea.sflag [#allocation3], 1
    %10 = vsyncpa %s9, 0
    loop: start=0, step=1, limit=4
    $region2: #{tpu_custom_call.1} parent=1 // loop_pre_header
      _
    $region3: #{tpu_custom_call.1} parent=1 // loop_header
      %s12 = sphi 0, %s16
      %p13 = scmp.ge.s32.totalorder %s12, 4
      %s19 = sphi 0, %s38
      %s20 = sphi 0, %s34
      %s21 = sphi 0, %s30
      %s22 = sphi 0, %s19
      %s23 = sphi 0, %s20
      %s24 = sphi 0, %s21
      %s25 = sphi 0, %s22
      %s26 = sphi 0, %s23
      %s27 = sphi 0, %s24
      %s41 = sphi 0, %s43
      %s44 = sphi 0, %s41
      %s45 = sphi 0, %s44
      %s61 = sphi 0, %s45
      %s67 = sphi 0, %s69
      %s70 = sphi 0, %s67
      %s71 = sphi 0, %s70
      %s87 = sphi 0, %s71
      %s95 = sphi 0, %s97
      %s98 = sphi 0, %s95
      %s99 = sphi 0, %s98
      %s115 = sphi 0, %s99
      %s125 = sphi 0, %s127
      %s128 = sphi 0, %s125
      %s129 = sphi 0, %s128
      %s145 = sphi 0, %s129
    $region4: #{tpu_custom_call.1} parent=1 // loop_header_branch
      %15 = sbr.rel (%p13) target = $region8
    $region5: #{tpu_custom_call.1} parent=1 // loop_body
      %s17 = ssub.s32 %s12, 1
      %s18 = ssub.s32 %s12, 2
      %s28 = sadd.s32 1, %s21
      %p29 = scmp.ge.s32.totalorder %s28, 1
      %s30 = scalar_select %p29, 0, %s28
      %s31 = sadd.s32 1, %s20
      %s32 = scalar_select %p29, %s31, %s20
      %p33 = scmp.ge.s32.totalorder %s32, 1
      %s34 = scalar_select %p33, 0, %s32
      %s35 = sadd.s32 1, %s19
      %s36 = scalar_select %p33, %s35, %s19
      %p37 = scmp.ge.s32.totalorder %s36, 2
      %s38 = scalar_select %p37, 0, %s36
      %s39 = ssub.s32 %s20, %s34
      %p40 = scmp.eq.s32.totalorder %s39, 0
      %s42 = sadd.s32 %s41, 1
      %s43 = scalar_select %p40, %s41, %s42
      %p46 = pneg %p40
      %p47 = scmp.eq.s32.totalorder %s12, 1
      %p48 = por %p46, %p47
      %p49 = scmp.ne.s32.totalorder %s41, %s44
      %p50 = scmp.eq.s32.totalorder %s12, 0
      %p51 = por %p49, %p50
      %p52 = scmp.ne.s32.totalorder %s41, %s44
      %p53 = scmp.eq.s32.totalorder %s17, 1
      %p54 = por %p52, %p53
      %p55 = scmp.ne.s32.totalorder %s44, %s45
      %p56 = scmp.eq.s32.totalorder %s17, 0
      %p57 = por %p55, %p56
      %p58 = scmp.ne.s32.totalorder %s44, %s45
      %p59 = scmp.eq.s32.totalorder %s18, 1
      %p60 = por %p58, %p59
      %p62 = scmp.ne.s32.totalorder %s45, %s61
      %p63 = scmp.eq.s32.totalorder %s18, 0
      %p64 = por %p62, %p63
      %s65 = ssub.s32 %s20, %s34
      %p66 = scmp.eq.s32.totalorder %s65, 0
      %s68 = sadd.s32 %s67, 1
      %s69 = scalar_select %p66, %s67, %s68
      %p72 = pneg %p66
      %p73 = scmp.eq.s32.totalorder %s12, 1
      %p74 = por %p72, %p73
      %p75 = scmp.ne.s32.totalorder %s67, %s70
      %p76 = scmp.eq.s32.totalorder %s12, 0
      %p77 = por %p75, %p76
      %p78 = scmp.ne.s32.totalorder %s67, %s70
      %p79 = scmp.eq.s32.totalorder %s17, 1
      %p80 = por %p78, %p79
      %p81 = scmp.ne.s32.totalorder %s70, %s71
      %p82 = scmp.eq.s32.totalorder %s17, 0
      %p83 = por %p81, %p82
      %p84 = scmp.ne.s32.totalorder %s70, %s71
      %p85 = scmp.eq.s32.totalorder %s18, 1
      %p86 = por %p84, %p85
      %p88 = scmp.ne.s32.totalorder %s71, %s87
      %p89 = scmp.eq.s32.totalorder %s18, 0
      %p90 = por %p88, %p89
      %s91 = ssub.s32 %s19, %s38
      %s92 = ssub.s32 %s21, %s30
      %s93 = sor.u32 %s91, %s92
      %p94 = scmp.eq.s32.totalorder %s93, 0
      %s96 = sadd.s32 %s95, 1
      %s97 = scalar_select %p94, %s95, %s96
      %p100 = pneg %p94
      %p101 = scmp.eq.s32.totalorder %s12, 1
      %p102 = por %p100, %p101
      %p103 = scmp.ne.s32.totalorder %s95, %s98
      %p104 = scmp.eq.s32.totalorder %s12, 0
      %p105 = por %p103, %p104
      %p106 = scmp.ne.s32.totalorder %s95, %s98
      %p107 = scmp.eq.s32.totalorder %s17, 1
      %p108 = por %p106, %p107
      %p109 = scmp.ne.s32.totalorder %s98, %s99
      %p110 = scmp.eq.s32.totalorder %s17, 0
      %p111 = por %p109, %p110
      %p112 = scmp.ne.s32.totalorder %s98, %s99
      %p113 = scmp.eq.s32.totalorder %s18, 1
      %p114 = por %p112, %p113
      %p116 = scmp.ne.s32.totalorder %s99, %s115
      %p117 = scmp.eq.s32.totalorder %s18, 0
      %p118 = por %p116, %p117
      %s119 = ssub.s32 %s19, %s38
      %s120 = ssub.s32 %s20, %s34
      %s121 = sor.u32 %s119, %s120
      %s122 = ssub.s32 %s21, %s30
      %s123 = sor.u32 %s121, %s122
      %p124 = scmp.eq.s32.totalorder %s123, 0
      %s126 = sadd.s32 %s125, 1
      %s127 = scalar_select %p124, %s125, %s126
      %p130 = pneg %p124
      %p131 = scmp.eq.s32.totalorder %s12, 1
      %p132 = por %p130, %p131
      %p133 = scmp.ne.s32.totalorder %s125, %s128
      %p134 = scmp.eq.s32.totalorder %s12, 0
      %p135 = por %p133, %p134
      %p136 = scmp.ne.s32.totalorder %s125, %s128
      %p137 = scmp.eq.s32.totalorder %s17, 1
      %p138 = por %p136, %p137
      %p139 = scmp.ne.s32.totalorder %s128, %s129
      %p140 = scmp.eq.s32.totalorder %s17, 0
      %p141 = por %p139, %p140
      %p142 = scmp.ne.s32.totalorder %s128, %s129
      %p143 = scmp.eq.s32.totalorder %s18, 1
      %p144 = por %p142, %p143
      %p146 = scmp.ne.s32.totalorder %s129, %s145
      %p147 = scmp.eq.s32.totalorder %s18, 0
      %p148 = por %p146, %p147
      %p149 = scmp.le.s32.totalorder 1, %s12
      %p150 = scmp.lt.s32.totalorder %s12, 3
      %p151 = pnand %p149, %p150
      %p152 = pneg %p151
      // Predicated region
      $region9: #{tpu_custom_call.1} parent=5 // pred_check
        _
      $region10: #{tpu_custom_call.1} parent=5 // pred_check_branch
        %154 = sbr.rel (%p151) target = $region12
      $region11: #{tpu_custom_call.1} parent=5 // pred_region
        %s155 = ssub.s32 %s12, 1
        // Predicated region
        $region13: #{tpu_custom_call.1} parent=11 // pred_check
          %p156 = pneg %p57
        $region14: #{tpu_custom_call.1} parent=11 // pred_check_branch
          %158 = sbr.rel (%p156) target = $region16
        $region15: #{tpu_custom_call.1} parent=11 // pred_region
          %p159 = scmp.lt.s32.totalorder %s23, 0
          %s160 = scalar_select %p159, %s23, 0
          %s161 = smul.addr %s160, 8
          %s162 = scalar_lea.vmem %s0, %s161
        $region16: #{tpu_custom_call.1} parent=11 // pred_fallthru
          _
        // Predicated region
        $region17: #{tpu_custom_call.1} parent=11 // pred_check
          %p163 = pneg %p83
        $region18: #{tpu_custom_call.1} parent=11 // pred_check_branch
          %165 = sbr.rel (%p163) target = $region20
        $region19: #{tpu_custom_call.1} parent=11 // pred_region
          %p166 = scmp.lt.s32.totalorder %s23, 0
          %s167 = scalar_select %p166, %s23, 0
          %s168 = smul.addr %s167, 8
          %s169 = scalar_lea.vmem %s1, %s168
        $region20: #{tpu_custom_call.1} parent=11 // pred_fallthru
          _
      $region12: #{tpu_custom_call.1} parent=5 // pred_fallthru
        _
      %p170 = scmp.lt.s32.totalorder %s12, 2
      // Predicated region
      $region21: #{tpu_custom_call.1} parent=5 // pred_check
        %p171 = pneg %p170
      $region22: #{tpu_custom_call.1} parent=5 // pred_check_branch
        %173 = sbr.rel (%p171) target = $region24
      $region23: #{tpu_custom_call.1} parent=5 // pred_region
        // Predicated region
        $region25: #{tpu_custom_call.1} parent=23 // pred_check
          %p174 = pneg %p105
        $region26: #{tpu_custom_call.1} parent=23 // pred_check_branch
          %176 = sbr.rel (%p174) target = $region28
        $region27: #{tpu_custom_call.1} parent=23 // pred_region
          %s177 = smul.u32 2, %s21
          %p178 = scmp.lt.s32.totalorder %s19, 1
          %s179 = scalar_select %p178, %s19, 1
          %p180 = scmp.lt.s32.totalorder %s177, 1
          %s181 = scalar_select %p180, %s177, 1
          %s182 = smul.addr %s179, 2
          %s183 = sadd.s32 %s181, %s182
          %s184 = smul.addr %s183, 4
          %s185 = scalar_lea.vmem %s2, %s184
          %s186 = smul.u32 2, %s21
        $region28: #{tpu_custom_call.1} parent=23 // pred_fallthru
          _
      $region24: #{tpu_custom_call.1} parent=5 // pred_fallthru
        _
      %p187 = scmp.le.s32.totalorder 1, %s12
      %p188 = scmp.lt.s32.totalorder %s12, 3
      %p189 = pnand %p187, %p188
      %p190 = pneg %p189
      // Predicated region
      $region29: #{tpu_custom_call.1} parent=5 // pred_check
        _
      $region30: #{tpu_custom_call.1} parent=5 // pred_check_branch
        %192 = sbr.rel (%p189) target = $region32
      $region31: #{tpu_custom_call.1} parent=5 // pred_region
        %s193 = ssub.s32 %s12, 1
        %p194 = scmp.lt.s32.totalorder %s23, 0
        %s195 = scalar_select %p194, %s23, 0
        %s196 = smul.addr %s195, 8
        %s197 = scalar_lea.vmem %s0, %s196
        %p198 = pneg %p57
        %p199 = pneg %p54
        %p200 = scmp.lt.s32.totalorder %s23, 0
        %s201 = scalar_select %p200, %s23, 0
        %s202 = smul.addr %s201, 8
        %s203 = scalar_lea.vmem %s1, %s202
        %p204 = pneg %p83
        %p205 = pneg %p80
        %s206 = smul.u32 2, %s24
        %p207 = scmp.lt.s32.totalorder %s22, 1
        %s208 = scalar_select %p207, %s22, 1
        %p209 = scmp.lt.s32.totalorder %s206, 1
        %s210 = scalar_select %p209, %s206, 1
        %s211 = smul.addr %s208, 2
        %s212 = sadd.s32 %s210, %s211
        %s213 = smul.addr %s212, 4
        %s214 = scalar_lea.vmem %s2, %s213
        %p215 = pneg %p111
        %p216 = pneg %p108
        %p217 = pneg %p141
        %p218 = pneg %p138
        %s219 = sand.u32 %s128, 1
        %s220 = scalar_lea.sflag [#allocation3], %s219
        %s221 = sand.u32 %s128, 1
        %s222 = smul.addr %s221, 16
        %s223 = scalar_lea.vmem [#allocation2], %s222
        %p224 = scmp.lt.s32.totalorder %s23, 0
        %s225 = scalar_select %p224, %s23, 0
        %s226 = smul.addr %s225, 8
        %s227 = scalar_lea.vmem %s0, %s226
        %p228 = scmp.lt.s32.totalorder %s23, 0
        %s229 = scalar_select %p228, %s23, 0
        %s230 = smul.addr %s229, 8
        %s231 = scalar_lea.vmem %s1, %s230
        %s232 = smul.u32 2, %s24
        %p233 = scmp.lt.s32.totalorder %s22, 1
        %s234 = scalar_select %p233, %s22, 1
        %p235 = scmp.lt.s32.totalorder %s232, 1
        %s236 = scalar_select %p235, %s232, 1
        %s237 = smul.addr %s234, 2
        %s238 = sadd.s32 %s236, %s237
        %s239 = smul.addr %s238, 4
        %s240 = scalar_lea.vmem %s2, %s239
        %s241 = smul.u32 2, %s24
        %s242 = smul.u32 2, %s24
        %v243 = vld [vmem:[%s240] sm:$0xff]
        %v244 = vld [vmem:[%s227] sm:$0xff]
        %v245 = vld [vmem:[%s231] sm:$0xff]
        %247 = vset.pattern.permute.xlu0 0
        %248 = vperm.xlu0 %247, %v245
        %v249 = vpop.permute.xlu0 %248
        %v252 = vcombine.high %v243, %v243
        %vm253 = vcmask 31744
        %v255 = vsel %vm253, %v244, 0
        %vm257 = vcmask 1043456
        %v258 = vsel %vm257, %v243, 0
        %v260 = vsel %vm257, %v252, 0
        %262 = vmatprep.subr.mxu0 %v260
        %263 = vmatpush1.msra.mxu0 %v258
        %264 = vmatprep.subr.mxu0 0.0
        %265 = vmatpush1.msra.mxu0 0.0
        %266 = vmatprep.subr.mxu0 0.0
        %267 = vmatpush1.msra.mxu0 0.0
        %268 = vmatprep.subr.mxu0 0.0
        %269 = vmatpush1.msra.mxu0 0.0
        %270 = vmatprep.subr.mxu0 0.0
        %271 = vmatpush1.msra.mxu0 0.0
        %272 = vmatprep.subr.mxu0 0.0
        %273 = vmatpush1.msra.mxu0 0.0
        %274 = vmatprep.subr.mxu0 0.0
        %275 = vmatpush1.msra.mxu0 0.0
        %276 = vmatprep.subr.mxu0 0.0
        %277 = vmatpush1.msra.mxu0 0.0
        %278 = vmatprep.subr.mxu0 0.0
        %279 = vmatpush1.msra.mxu0 0.0
        %280 = vmatprep.subr.mxu0 0.0
        %281 = vmatpush1.msra.mxu0 0.0
        %282 = vmatprep.subr.mxu0 0.0
        %283 = vmatpush1.msra.mxu0 0.0
        %284 = vmatprep.subr.mxu0 0.0
        %285 = vmatpush1.msra.mxu0 0.0
        %286 = vmatprep.subr.mxu0 0.0
        %287 = vmatpush1.msra.mxu0 0.0
        %288 = vmatprep.subr.mxu0 0.0
        %289 = vmatpush1.msra.mxu0 0.0
        %290 = vmatprep.subr.mxu0 0.0
        %291 = vmatpush1.msra.mxu0 0.0
        %292 = vmatprep.subr.mxu0 0.0
        %293 = vmatpush1.msra.mxu0 0.0
        %294 = vmatprep.subr.mxu0 0.0
        %295 = vmatpush1.msra.mxu0 0.0
        %296 = vmatprep.subr.mxu0 0.0
        %297 = vmatpush1.msra.mxu0 0.0
        %298 = vmatprep.subr.mxu0 0.0
        %299 = vmatpush1.msra.mxu0 0.0
        %300 = vmatprep.subr.mxu0 0.0
        %301 = vmatpush1.msra.mxu0 0.0
        %302 = vmatprep.subr.mxu0 0.0
        %303 = vmatpush1.msra.mxu0 0.0
        %304 = vmatprep.subr.mxu0 0.0
        %305 = vmatpush1.msra.mxu0 0.0
        %306 = vmatprep.subr.mxu0 0.0
        %307 = vmatpush1.msra.mxu0 0.0
        %308 = vmatprep.subr.mxu0 0.0
        %309 = vmatpush1.msra.mxu0 0.0
        %310 = vmatprep.subr.mxu0 0.0
        %311 = vmatpush1.msra.mxu0 0.0
        %312 = vmatprep.subr.mxu0 0.0
        %313 = vmatpush1.msra.mxu0 0.0
        %314 = vmatprep.subr.mxu0 0.0
        %315 = vmatpush1.msra.mxu0 0.0
        %316 = vmatprep.subr.mxu0 0.0
        %317 = vmatpush1.msra.mxu0 0.0
        %318 = vmatprep.subr.mxu0 0.0
        %319 = vmatpush1.msra.mxu0 0.0
        %320 = vmatprep.subr.mxu0 0.0
        %321 = vmatpush1.msra.mxu0 0.0
        %322 = vmatprep.subr.mxu0 0.0
        %323 = vmatpush1.msra.mxu0 0.0
        %324 = vmatprep.subr.mxu0 0.0
        %325 = vmatpush1.msra.mxu0 0.0
        %326 = vmatprep.mubr.f32.mxu0 0.0
        %327 = vmatmul.mubr.f32.gmra.mrb[0].mxu0 %v255
        %v328 = vpop.f32.mrb[0].mxu0
        %v329 = vadd.f32 %v249, %v328
        %v330 = vpop.f32.mrb[0].mxu0
        %v331 = vadd.f32 %v249, %v330
        %332 = vdwg.mxu0
        %v333 = vxor.u32 %v329, 2147483648
        %v334 = vxor.u32 %v331, 2147483648
        %v335 = vmul.f32 %v333, 1.442695
        %v336 = vpow.pop %v335
        %v337 = vmul.f32 %v334, 1.442695
        %v338 = vpow.pop %v337
        %v339 = vadd.f32 %v336, 1.0
        %v340 = vadd.f32 %v338, 1.0
        %v341 = vrcp.pop %v339
        %v342 = vmul.f32 1.0, %v341
        %v343 = vrcp.pop %v340
        %v344 = vmul.f32 1.0, %v343
        %v345 = vmul.f32 %v329, %v342
        %v346 = vmul.f32 %v331, %v344
        %347 = vst [vmem:[%s223] sm:$0xff] %v345
        %348 = vst [vmem:[%s223 + $0x8] sm:$0xff] %v346
        %s349 = sand.u32 %s128, 1
        %s350 = scalar_lea.sflag [#allocation3], %s349
        %s351 = sand.u32 %s128, 1
        %s352 = smul.addr %s351, 16
        %s353 = scalar_lea.vmem [#allocation2], %s352
        // Predicated region
        $region33: #{tpu_custom_call.1} parent=31 // pred_check
          %p354 = pneg %p138
        $region34: #{tpu_custom_call.1} parent=31 // pred_check_branch
          %356 = sbr.rel (%p354) target = $region36
        $region35: #{tpu_custom_call.1} parent=31 // pred_region
          %s357 = smul.u32 2, %s24
          %s359 = ssub.s32 256, 256
          %360 = vsyncadd %s350, %s359
          %s361 = smul.addr %s23, 2
          %s362 = sadd.s32 %s357, %s361
          %s363 = smul.addr %s22, 2
          %s364 = sadd.s32 %s362, %s363
          %s365 = smul.addr %s364, 128
          %s366 = scalar_lea.hbm %s3, %s365
          %s368 = sshll.u32 %s353, 4
          %s369 = int_to_ptr.vmem [resolvable:$true] %s368
          %371 = dma.vmem_to_hbm [thread:$0]  %s369, 256, %s366, %s350
        $region36: #{tpu_custom_call.1} parent=31 // pred_fallthru
          _
      $region32: #{tpu_custom_call.1} parent=5 // pred_fallthru
        _
      %p372 = scmp.le.s32.totalorder 2, %s12
      // Predicated region
      $region37: #{tpu_custom_call.1} parent=5 // pred_check
        %p373 = pneg %p372
      $region38: #{tpu_custom_call.1} parent=5 // pred_check_branch
        %375 = sbr.rel (%p373) target = $region40
      $region39: #{tpu_custom_call.1} parent=5 // pred_region
        %s376 = ssub.s32 %s12, 2
        // Predicated region
        $region41: #{tpu_custom_call.1} parent=39 // pred_check
          %p377 = pneg %p144
        $region42: #{tpu_custom_call.1} parent=39 // pred_check_branch
          %379 = sbr.rel (%p377) target = $region44
        $region43: #{tpu_custom_call.1} parent=39 // pred_region
          %s380 = sand.u32 %s129, 1
          %s381 = scalar_lea.sflag [#allocation3], %s380
          %s382 = sand.u32 %s129, 1
          %s383 = smul.addr %s382, 16
          %s384 = scalar_lea.vmem [#allocation2], %s383
          %385 = dma.done %s381, 256
        $region44: #{tpu_custom_call.1} parent=39 // pred_fallthru
          _
      $region40: #{tpu_custom_call.1} parent=5 // pred_fallthru
        _
    $region6: #{tpu_custom_call.1} parent=1 // loop_footer
      %s16 = sadd.s32 1, %s12
    $region7: #{tpu_custom_call.1} parent=1 // loop_footer_branch
      %11 = sbr.rel target = $region3
    $region8: #{tpu_custom_call.1} parent=1 // loop_exit
      _
    %386 = vsyncpa [#allocation3], 1
    %s387 = scalar_lea.sflag [#allocation3], 1
    %388 = vsyncpa %s387, 1

</llo_original>
